<compile_context>
chip_gen: v6e
topology: v6e:2x2x1
jax: 0.10.0
libtpu: 0.0.40
codegen_flags: <defaults>
</compile_context>

<pallas_src>
import functools

import jax
import jax.numpy as jnp
from jax.experimental import pallas as pl
from jax.experimental.pallas import tpu as pltpu


def _mixln_kernel(split_ref, x_ref, w_ref, b_ref, o_ref, *, eps, tm):
    """LayerNorm over last dim of a (tm, D) row tile with split main/aux affine.

    split_ref: SMEM (1,) int32 — global row index where params switch main->aux.
    x_ref:     VMEM (tm, D) input tile.
    w_ref/b_ref: VMEM (2, D) f32 affine params; row 0 = main, row 1 = aux.
    o_ref:     VMEM (tm, D) output tile.
    """
    split = split_ref[0]
    row0 = pl.program_id(0) * tm

    x = x_ref[...].astype(jnp.float32)
    mean = jnp.mean(x, axis=-1, keepdims=True)
    centered = x - mean
    var = jnp.mean(centered * centered, axis=-1, keepdims=True)  # biased, like torch
    y = centered * jax.lax.rsqrt(var + eps)

    tile_all_main = row0 + tm <= split   # whole tile uses main params
    tile_all_aux = row0 >= split         # whole tile uses aux params

    @pl.when(tile_all_main)
    def _():
        o_ref[...] = (y * w_ref[0:1, :] + b_ref[0:1, :]).astype(o_ref.dtype)

    @pl.when(tile_all_aux)
    def _():
        o_ref[...] = (y * w_ref[1:2, :] + b_ref[1:2, :]).astype(o_ref.dtype)

    # Boundary tile (at most one per call): per-row select between groups.
    @pl.when(jnp.logical_not(jnp.logical_or(tile_all_main, tile_all_aux)))
    def _():
        rows = jax.lax.broadcasted_iota(jnp.int32, (tm, 1), 0) + row0
        use_main = rows < split
        w = jnp.where(use_main, w_ref[0:1, :], w_ref[1:2, :])
        b = jnp.where(use_main, b_ref[0:1, :], b_ref[1:2, :])
        o_ref[...] = (y * w + b).astype(o_ref.dtype)


def _pick_row_tile(n_rows, d, dtype):
    """Largest sublane-aligned row tile with ~4 MiB of f32-equivalent work.

    Budgeting in f32-equivalent elements (rather than input bytes) keeps the
    in-kernel f32 temporaries bounded even for bf16/int8 inputs, so the total
    footprint (double-buffered in/out + temps) stays ~30-40 MiB — safe on
    v7x's 64 MiB VMEM, generous on v5e/v6e's 128 MiB.
    """
    itemsize = jnp.dtype(dtype).itemsize
    sublane = {1: 32, 2: 16}.get(itemsize, 8)  # f32->8, bf16->16, int8/fp8->32
    target_elems = (4 * 1024 * 1024) // 4      # ~1M elements -> 4 MiB in f32
    tm = max(target_elems // max(d, 1), sublane)
    tm = (tm // sublane) * sublane
    # Never make the tile (much) bigger than the row count itself.
    rows_ceil = ((max(n_rows, 1) + sublane - 1) // sublane) * sublane
    tm = min(tm, rows_ceil)
    return max(tm, sublane)


def _layernorm_split(x2d, w2, b2, split, *, eps):
    """LayerNorm over last dim of (R, D); rows < split use params[0], else params[1]."""
    R, D = x2d.shape
    tm = _pick_row_tile(R, D, x2d.dtype)
    grid = (pl.cdiv(R, tm),)
    kernel = functools.partial(_mixln_kernel, eps=eps, tm=tm)

    # VMEM budget from the actual footprint:
    #   double-buffered input + output tiles, ~6 live f32 (tm, D) temporaries,
    #   plus a few MiB of margin for Mosaic internal scratch.
    itemsize = jnp.dtype(x2d.dtype).itemsize
    tile_in_bytes = tm * D * itemsize
    tile_f32_bytes = tm * D * 4
    vmem_limit = 4 * tile_in_bytes + 6 * tile_f32_bytes + 4 * 1024 * 1024

    split_arr = jnp.array([split], dtype=jnp.int32)
    return pl.pallas_call(
        kernel,
        out_shape=jax.ShapeDtypeStruct((R, D), x2d.dtype),
        grid_spec=pltpu.PrefetchScalarGridSpec(
            num_scalar_prefetch=1,
            grid=grid,
            in_specs=[
                pl.BlockSpec((tm, D), lambda i, split_ref: (i, 0)),
                pl.BlockSpec((2, D), lambda i, split_ref: (0, 0)),
                pl.BlockSpec((2, D), lambda i, split_ref: (0, 0)),
            ],
            out_specs=pl.BlockSpec((tm, D), lambda i, split_ref: (i, 0)),
        ),
        compiler_params=pltpu.CompilerParams(
            dimension_semantics=("parallel",),
            vmem_limit_bytes=int(vmem_limit),
        ),
    )(split_arr, x2d, w2, b2)


def mix_layer_norm(x, params, batch_type="clean", eps=1e-6):
    """Forward pass of MixLayerNorm.

    x: [..., D] (for 'mix', leading dim is the batch). Normalization over last dim.
    params: dict with 'main_w', 'main_b', 'aux_w', 'aux_b', each shape (D,).
    batch_type: 'clean' | 'adv' | 'mix'.
    """
    orig_shape = x.shape
    D = orig_shape[-1]
    R = x.size // D
    x2 = x.reshape(R, D)

    w2 = jnp.stack([params["main_w"], params["aux_w"]]).astype(jnp.float32)  # (2, D)
    b2 = jnp.stack([params["main_b"], params["aux_b"]]).astype(jnp.float32)  # (2, D)

    if batch_type == "clean":
        split = R                      # every row uses main params
    elif batch_type == "adv":
        split = 0                      # every row uses aux params
    else:
        assert batch_type == "mix"
        B = orig_shape[0]
        rows_per_batch = R // B
        split = (B // 2) * rows_per_batch   # x[:B//2] -> main, x[B//2:] -> aux

    y = _layernorm_split(x2, w2, b2, split, eps=eps)
    return y.reshape(orig_shape)


def _reference_layernorm(x, w, b, eps):
    xf = x.astype(jnp.float32)
    mean = jnp.mean(xf, axis=-1, keepdims=True)
    var = jnp.mean((xf - mean) ** 2, axis=-1, keepdims=True)
    return ((xf - mean) * jax.lax.rsqrt(var + eps) * w + b).astype(x.dtype)


if __name__ == "__main__":
    key = jax.random.PRNGKey(0)
    k_x, k_mw, k_mb, k_aw, k_ab = jax.random.split(key, 5)

    B, L, D = 2, 8, 32  # batch (even -> 'mix' splits cleanly), seq, d_model
    eps = 1e-6

    x = jax.random.normal(k_x, (B, L, D), dtype=jnp.float32)

    # Deterministic init perturbed around the PyTorch defaults (weight=1,
    # bias=0) so main vs aux actually differ.
    params = {
        "main_w": 1.0 + 0.1 * jax.random.normal(k_mw, (D,), dtype=jnp.float32),
        "main_b": 0.1 * jax.random.normal(k_mb, (D,), dtype=jnp.float32),
        "aux_w": 1.0 + 0.1 * jax.random.normal(k_aw, (D,), dtype=jnp.float32),
        "aux_b": 0.1 * jax.random.normal(k_ab, (D,), dtype=jnp.float32),
    }

    # Run all three batch_type modes through the Pallas kernel.
    y_clean = jax.block_until_ready(mix_layer_norm(x, params, "clean", eps))
    y_adv = jax.block_until_ready(mix_layer_norm(x, params, "adv", eps))
    y_mix = jax.block_until_ready(mix_layer_norm(x, params, "mix", eps))

    # Sanity-check against a plain-JAX reference of the PyTorch semantics.
    ref_clean = _reference_layernorm(x, params["main_w"], params["main_b"], eps)
    ref_adv = _reference_layernorm(x, params["aux_w"], params["aux_b"], eps)
    half = B // 2
    ref_mix = jnp.concatenate(
        (
            _reference_layernorm(x[:half], params["main_w"], params["main_b"], eps),
            _reference_layernorm(x[half:], params["aux_w"], params["aux_b"], eps),
        ),
        axis=0,
    )

    assert jnp.allclose(y_clean, ref_clean, atol=1e-5, rtol=1e-5)
    assert jnp.allclose(y_adv, ref_adv, atol=1e-5, rtol=1e-5)
    assert jnp.allclose(y_mix, ref_mix, atol=1e-5, rtol=1e-5)

    # Also exercise an odd batch for 'mix' (uneven halves, boundary tile path).
    B_odd = 3
    x_odd = jax.random.normal(jax.random.PRNGKey(1), (B_odd, L, D), dtype=jnp.float32)
    y_mix_odd = jax.block_until_ready(mix_layer_norm(x_odd, params, "mix", eps))
    h = B_odd // 2
    ref_mix_odd = jnp.concatenate(
        (
            _reference_layernorm(x_odd[:h], params["main_w"], params["main_b"], eps),
            _reference_layernorm(x_odd[h:], params["aux_w"], params["aux_b"], eps),
        ),
        axis=0,
    )
    assert jnp.allclose(y_mix_odd, ref_mix_odd, atol=1e-5, rtol=1e-5)

    print("KERNEL_OK")
</pallas_src>

<mosaic_0001>
module attributes {stable_mosaic.version = 11 : i64} {
  func.func @_mixln_kernel(%arg0: i32, %arg1: memref<1xi32, #tpu.memory_space<smem>>, %arg2: memref<16x32xf32, #tpu.memory_space<vmem>>, %arg3: memref<2x32xf32, #tpu.memory_space<vmem>>, %arg4: memref<2x32xf32, #tpu.memory_space<vmem>>, %arg5: memref<16x32xf32, #tpu.memory_space<vmem>>) attributes {dimension_semantics = [#tpu.dimension_semantics<parallel>], iteration_bounds = array<i64: 1>, scalar_prefetch = 1 : i64, scratch_operands = 0 : i64, tpu.core_type = #tpu.core_type<tc>, window_params = [{transform_indices = @transform_0, window_bounds = array<i64: 16, 32>}, {pipeline_mode = #tpu.pipeline_mode<synchronous>, transform_indices = @transform_1, window_bounds = array<i64: 2, 32>}, {pipeline_mode = #tpu.pipeline_mode<synchronous>, transform_indices = @transform_2, window_bounds = array<i64: 2, 32>}, {transform_indices = @transform_3, window_bounds = array<i64: 16, 32>}]} {
    %c0 = arith.constant 0 : index
    %0 = memref.load %arg1[%c0] : memref<1xi32, #tpu.memory_space<smem>>
    %c16_i32 = arith.constant 16 : i32
    %1 = arith.muli %arg0, %c16_i32 : i32
    %c0_0 = arith.constant 0 : index
    %c0_1 = arith.constant 0 : index
    %2 = vector.load %arg2[%c0_0, %c0_1] : memref<16x32xf32, #tpu.memory_space<vmem>>, vector<16x32xf32>
    %cst = arith.constant dense<0.000000e+00> : vector<16xf32>
    %3 = vector.multi_reduction <add>, %2, %cst [1] : vector<16x32xf32> to vector<16xf32>
    %4 = vector.shape_cast %3 : vector<16xf32> to vector<16x1xf32>
    %cst_2 = arith.constant 3.200000e+01 : f32
    %5 = vector.broadcast %cst_2 : f32 to vector<16x1xf32>
    %6 = arith.divf %4, %5 : vector<16x1xf32>
    %7 = vector.broadcast %6 : vector<16x1xf32> to vector<16x32xf32>
    %8 = arith.subf %2, %7 : vector<16x32xf32>
    %9 = arith.mulf %8, %8 : vector<16x32xf32>
    %cst_3 = arith.constant dense<0.000000e+00> : vector<16xf32>
    %10 = vector.multi_reduction <add>, %9, %cst_3 [1] : vector<16x32xf32> to vector<16xf32>
    %11 = vector.shape_cast %10 : vector<16xf32> to vector<16x1xf32>
    %cst_4 = arith.constant 3.200000e+01 : f32
    %12 = vector.broadcast %cst_4 : f32 to vector<16x1xf32>
    %13 = arith.divf %11, %12 : vector<16x1xf32>
    %cst_5 = arith.constant 9.99999997E-7 : f32
    %14 = vector.broadcast %cst_5 : f32 to vector<16x1xf32>
    %15 = arith.addf %13, %14 : vector<16x1xf32>
    %16 = math.rsqrt %15 : vector<16x1xf32>
    %17 = vector.broadcast %16 : vector<16x1xf32> to vector<16x32xf32>
    %18 = arith.mulf %8, %17 : vector<16x32xf32>
    %c16_i32_6 = arith.constant 16 : i32
    %19 = arith.addi %1, %c16_i32_6 : i32
    %20 = arith.cmpi sle, %19, %0 : i32
    %21 = arith.cmpi sge, %1, %0 : i32
    %22 = arith.extui %20 : i1 to i32
    %c0_i32 = arith.constant 0 : i32
    %23 = arith.cmpi ne, %22, %c0_i32 : i32
    scf.if %23 {
      %c0_9 = arith.constant 0 : index
      %c0_10 = arith.constant 0 : index
      %30 = vector.load %arg3[%c0_9, %c0_10] : memref<2x32xf32, #tpu.memory_space<vmem>>, vector<1x32xf32>
      %31 = vector.broadcast %30 : vector<1x32xf32> to vector<16x32xf32>
      %32 = arith.mulf %18, %31 : vector<16x32xf32>
      %c0_11 = arith.constant 0 : index
      %c0_12 = arith.constant 0 : index
      %33 = vector.load %arg4[%c0_11, %c0_12] : memref<2x32xf32, #tpu.memory_space<vmem>>, vector<1x32xf32>
      %34 = vector.broadcast %33 : vector<1x32xf32> to vector<16x32xf32>
      %35 = arith.addf %32, %34 : vector<16x32xf32>
      %c0_13 = arith.constant 0 : index
      %c0_14 = arith.constant 0 : index
      %36 = vector.load %arg5[%c0_13, %c0_14] : memref<16x32xf32, #tpu.memory_space<vmem>>, vector<16x32xf32>
      tpu.vector_store %arg5[%c0_13, %c0_14], %35 {strides = array<i32>} : memref<16x32xf32, #tpu.memory_space<vmem>>, vector<16x32xf32>,
    } else {
    }
    %24 = arith.extui %21 : i1 to i32
    %c0_i32_7 = arith.constant 0 : i32
    %25 = arith.cmpi ne, %24, %c0_i32_7 : i32
    scf.if %25 {
      %c1 = arith.constant 1 : index
      %c0_9 = arith.constant 0 : index
      %30 = vector.load %arg3[%c1, %c0_9] : memref<2x32xf32, #tpu.memory_space<vmem>>, vector<1x32xf32>
      %31 = vector.broadcast %30 : vector<1x32xf32> to vector<16x32xf32>
      %32 = arith.mulf %18, %31 : vector<16x32xf32>
      %c1_10 = arith.constant 1 : index
      %c0_11 = arith.constant 0 : index
      %33 = vector.load %arg4[%c1_10, %c0_11] : memref<2x32xf32, #tpu.memory_space<vmem>>, vector<1x32xf32>
      %34 = vector.broadcast %33 : vector<1x32xf32> to vector<16x32xf32>
      %35 = arith.addf %32, %34 : vector<16x32xf32>
      %c0_12 = arith.constant 0 : index
      %c0_13 = arith.constant 0 : index
      %36 = vector.load %arg5[%c0_12, %c0_13] : memref<16x32xf32, #tpu.memory_space<vmem>>, vector<16x32xf32>
      tpu.vector_store %arg5[%c0_12, %c0_13], %35 {strides = array<i32>} : memref<16x32xf32, #tpu.memory_space<vmem>>, vector<16x32xf32>,
    } else {
    }
    %26 = arith.ori %20, %21 : i1
    %true = arith.constant true
    %27 = arith.xori %26, %true : i1
    %28 = arith.extui %27 : i1 to i32
    %c0_i32_8 = arith.constant 0 : i32
    %29 = arith.cmpi ne, %28, %c0_i32_8 : i32
    scf.if %29 {
      %30 = tpu.iota {dimensions = array<i32: 0>} : vector<16x1xi32>
      %31 = vector.broadcast %1 : i32 to vector<16x1xi32>
      %32 = arith.addi %30, %31 : vector<16x1xi32>
      %33 = vector.broadcast %0 : i32 to vector<16x1xi32>
      %34 = arith.cmpi slt, %32, %33 : vector<16x1xi32>
      %c0_9 = arith.constant 0 : index
      %c0_10 = arith.constant 0 : index
      %35 = vector.load %arg3[%c0_9, %c0_10] : memref<2x32xf32, #tpu.memory_space<vmem>>, vector<1x32xf32>
      %c1 = arith.constant 1 : index
      %c0_11 = arith.constant 0 : index
      %36 = vector.load %arg3[%c1, %c0_11] : memref<2x32xf32, #tpu.memory_space<vmem>>, vector<1x32xf32>
      %37 = vector.shape_cast %34 : vector<16x1xi1> to vector<16x1xi1>
      %38 = vector.broadcast %37 : vector<16x1xi1> to vector<16x32xi1>
      %39 = vector.shape_cast %35 : vector<1x32xf32> to vector<1x32xf32>
      %40 = vector.broadcast %39 : vector<1x32xf32> to vector<16x32xf32>
      %41 = vector.shape_cast %36 : vector<1x32xf32> to vector<1x32xf32>
      %42 = vector.broadcast %41 : vector<1x32xf32> to vector<16x32xf32>
      %43 = arith.select %38, %40, %42 : vector<16x32xi1>, vector<16x32xf32>
      %c0_12 = arith.constant 0 : index
      %c0_13 = arith.constant 0 : index
      %44 = vector.load %arg4[%c0_12, %c0_13] : memref<2x32xf32, #tpu.memory_space<vmem>>, vector<1x32xf32>
      %c1_14 = arith.constant 1 : index
      %c0_15 = arith.constant 0 : index
      %45 = vector.load %arg4[%c1_14, %c0_15] : memref<2x32xf32, #tpu.memory_space<vmem>>, vector<1x32xf32>
      %46 = vector.shape_cast %34 : vector<16x1xi1> to vector<16x1xi1>
      %47 = vector.broadcast %46 : vector<16x1xi1> to vector<16x32xi1>
      %48 = vector.shape_cast %44 : vector<1x32xf32> to vector<1x32xf32>
      %49 = vector.broadcast %48 : vector<1x32xf32> to vector<16x32xf32>
      %50 = vector.shape_cast %45 : vector<1x32xf32> to vector<1x32xf32>
      %51 = vector.broadcast %50 : vector<1x32xf32> to vector<16x32xf32>
      %52 = arith.select %47, %49, %51 : vector<16x32xi1>, vector<16x32xf32>
      %53 = arith.mulf %18, %43 : vector<16x32xf32>
      %54 = arith.addf %53, %52 : vector<16x32xf32>
      %c0_16 = arith.constant 0 : index
      %c0_17 = arith.constant 0 : index
      %55 = vector.load %arg5[%c0_16, %c0_17] : memref<16x32xf32, #tpu.memory_space<vmem>>, vector<16x32xf32>
      tpu.vector_store %arg5[%c0_16, %c0_17], %54 {strides = array<i32>} : memref<16x32xf32, #tpu.memory_space<vmem>>, vector<16x32xf32>,
    } else {
    }
    return
  }
  func.func @transform_0(%arg0: i32, %arg1: memref<1xi32, #tpu.memory_space<smem>>) -> (i32, i32) {
    %c0_i32 = arith.constant 0 : i32
    %c0_i32_0 = arith.constant 0 : i32
    return %arg0, %c0_i32 : i32, i32
  }
  func.func @transform_1(%arg0: i32, %arg1: memref<1xi32, #tpu.memory_space<smem>>) -> (i32, i32) {
    %c0_i32 = arith.constant 0 : i32
    %c0_i32_0 = arith.constant 0 : i32
    %c0_i32_1 = arith.constant 0 : i32
    return %c0_i32, %c0_i32_0 : i32, i32
  }
  func.func @transform_2(%arg0: i32, %arg1: memref<1xi32, #tpu.memory_space<smem>>) -> (i32, i32) {
    %c0_i32 = arith.constant 0 : i32
    %c0_i32_0 = arith.constant 0 : i32
    %c0_i32_1 = arith.constant 0 : i32
    return %c0_i32, %c0_i32_0 : i32, i32
  }
  func.func @transform_3(%arg0: i32, %arg1: memref<1xi32, #tpu.memory_space<smem>>) -> (i32, i32) {
    %c0_i32 = arith.constant 0 : i32
    %c0_i32_0 = arith.constant 0 : i32
    return %arg0, %c0_i32 : i32, i32
  }
}

</mosaic_0001>

<llo_original>
// kernel: tpu_custom_call.1
$region0: #{tpu_custom_call.1}
  #allocation0 [shape = 'u32[]', space=smem, size = 0x4, offset = 0x4, fixed_abs, tag = 'smem constant byte address 0x4 - core index']
  #allocation1 [shape = 'u32[144,128]{1,0:T(1,128)}', space=vmem, size = 0x12000, scoped, tag = 'internal scratch']
  #allocation2 [shape = 's32[1]{0}', space=sflag, size = 0x4, scoped, tag = 'scoped memory for tpu_custom_call.1']
  #allocation3 [shape = 's32[1]{0:T(128)S(6)}', space=smem, size = 0x200, scoped, tag = 'prefetched SMEM operand 0']
  %s0 = inlined_call_operand.<no memory space> [shape: s32[1], index: 0, kind: input, shape index: {}]
  %s1 = inlined_call_operand.hbm [shape: f32[16,32], index: 1, kind: input, shape index: {}]
  %s2 = inlined_call_operand.vmem [shape: f32[2,32], index: 2, kind: input, shape index: {}]
  %s3 = inlined_call_operand.vmem [shape: f32[2,32], index: 3, kind: input, shape index: {}]
  %s4 = inlined_call_operand.hbm [shape: f32[16,32], index: 4, kind: output, shape index: {}]
  %s5 = sld [smem:[#allocation0]]
  $region38: #{tpu_custom_call.1} parent=0
    _
  %s7 = ssub.s32 1, %s5
  %s8 = scalar_select 0, %s7, %s5
  %9 = sst [smem:[#allocation3]] %s0
  $region1: #{tpu_custom_call.1} parent=0
    #allocation4 [shape = 'u8[8192]{0}', space=vmem, size = 0x2000, scoped, tag = 'input window, operand 1, single buffered']
    #allocation5 [shape = 's32[1]{0}', space=sflag, size = 0x4, scoped, tag = 'scoped memory for tpu_custom_call.1']
    #allocation6 [shape = 's32[1]{0}', space=sflag, size = 0x4, scoped, tag = 'scoped memory for tpu_custom_call.1']
    #allocation7 [shape = 'u8[8192]{0}', space=vmem, size = 0x2000, scoped, tag = 'output window, operand 0, single buffered']
    %10 = vsyncpa [#allocation5], 0
    %11 = vsyncpa [#allocation6], 0
    // Predicated region
    $region2: #{tpu_custom_call.1} parent=1 // pred_check
      _
    $region3: #{tpu_custom_call.1} parent=1 // pred_check_branch
      %13 = sbr.rel (0) target = $region5
    $region4: #{tpu_custom_call.1} parent=1 // pred_region
      %s15 = ssub.s32 256, 256
      %16 = vsyncadd [#allocation5], %s15
      %s17 = sshll.u32 [#allocation4], 4
      %s18 = int_to_ptr.vmem [resolvable:$true] %s17
      %23 = dma.hbm_to_vmem [thread:$0]  %s1, 256, %s18, [#allocation5], 128, 128, 8
    $region5: #{tpu_custom_call.1} parent=1 // pred_fallthru
      _
    // Predicated region
    $region6: #{tpu_custom_call.1} parent=1 // pred_check
      _
    $region7: #{tpu_custom_call.1} parent=1 // pred_check_branch
      %25 = sbr.rel (0) target = $region9
    $region8: #{tpu_custom_call.1} parent=1 // pred_region
      _
    $region9: #{tpu_custom_call.1} parent=1 // pred_fallthru
      _
    // Predicated region
    $region10: #{tpu_custom_call.1} parent=1 // pred_check
      _
    $region11: #{tpu_custom_call.1} parent=1 // pred_check_branch
      %27 = sbr.rel (0) target = $region13
    $region12: #{tpu_custom_call.1} parent=1 // pred_region
      _
    $region13: #{tpu_custom_call.1} parent=1 // pred_fallthru
      _
    // Predicated region
    $region14: #{tpu_custom_call.1} parent=1 // pred_check
      _
    $region15: #{tpu_custom_call.1} parent=1 // pred_check_branch
      %29 = sbr.rel (0) target = $region17
    $region16: #{tpu_custom_call.1} parent=1 // pred_region
      %30 = dma.done [#allocation5], 256
    $region17: #{tpu_custom_call.1} parent=1 // pred_fallthru
      _
    %s31 = sld [smem:[#allocation3]]
    %s32 = smul.u32 0, 16
    %v33 = vld [vmem:[#allocation4] sm:$0xff]
    %v34 = vld [vmem:[#allocation4 + $0x8] sm:$0xff]
    %vm35 = vcmask 261120
    %v36 = vsel %vm35, %v33, 0.0
    %37 = vadd.xlane.f32.xlu0 %v36
    %v38 = vpop.xlane.xlu0 %37
    %v39 = vsel %vm35, %v34, 0.0
    %40 = vadd.xlane.f32.xlu0 %v39
    %v41 = vpop.xlane.xlu0 %40
    %v42 = vrcp.pop 32.0
    %v43 = vmul.f32 %v38, %v42
    %v44 = vmul.f32 %v41, %v42
    %v45 = vsub.f32 %v33, %v43
    %v46 = vsub.f32 %v34, %v44
    %v47 = vmul.f32 %v45, %v45
    %v48 = vmul.f32 %v46, %v46
    %v49 = vsel %vm35, %v47, 0.0
    %50 = vadd.xlane.f32.xlu0 %v49
    %v51 = vpop.xlane.xlu0 %50
    %v52 = vsel %vm35, %v48, 0.0
    %53 = vadd.xlane.f32.xlu0 %v52
    %v54 = vpop.xlane.xlu0 %53
    %v55 = vmul.f32 %v51, %v42
    %v56 = vmul.f32 %v54, %v42
    %v57 = vadd.f32 %v55, 1e-06
    %v58 = vadd.f32 %v56, 1e-06
    %v59 = vrsqrt.pop %v57
    %v60 = vrsqrt.pop %v58
    %v61 = vmul.f32 %v45, %v59
    %v62 = vmul.f32 %v46, %v60
    %s63 = sadd.s32 %s32, 16
    %p64 = scmp.le.s32.totalorder %s63, %s31
    %p65 = scmp.ge.s32.totalorder %s32, %s31
    // Predicated region
    $region18: #{tpu_custom_call.1} parent=1 // pred_check
      %p66 = pneg %p64
    $region19: #{tpu_custom_call.1} parent=1 // pred_check_branch
      %68 = sbr.rel (%p66) target = $region21
    $region20: #{tpu_custom_call.1} parent=1 // pred_region
      %v69 = vld [vmem:[%s2] sm:$0x1]
      %v70 = vlaneseq
      %v71 = vshrl.u32 %v70, 7
      %v72 = vsub.s32 0, %v71
      %v73 = vrot.slane %v69, %v72
      %v74 = vmul.f32 %v61, %v73
      %v75 = vmul.f32 %v62, %v73
      %v76 = vld [vmem:[%s3] sm:$0x1]
      %v77 = vlaneseq
      %v78 = vshrl.u32 %v77, 7
      %v79 = vsub.s32 0, %v78
      %v80 = vrot.slane %v76, %v79
      %v81 = vadd.f32 %v74, %v80
      %v82 = vadd.f32 %v75, %v80
      %83 = vst.msk [vmem:[#allocation7] sm:$0xff] %vm35, %v81
      %84 = vst.msk [vmem:[#allocation7 + $0x8] sm:$0xff] %vm35, %v82
    $region21: #{tpu_custom_call.1} parent=1 // pred_fallthru
      _
    // Predicated region
    $region22: #{tpu_custom_call.1} parent=1 // pred_check
      %p85 = pneg %p65
    $region23: #{tpu_custom_call.1} parent=1 // pred_check_branch
      %87 = sbr.rel (%p85) target = $region25
    $region24: #{tpu_custom_call.1} parent=1 // pred_region
      %v88 = vld [vmem:[%s2 + $0x1] sm:$0x1]
      %v89 = vlaneseq
      %v90 = vshrl.u32 %v89, 7
      %v91 = vsub.s32 0, %v90
      %v92 = vrot.slane %v88, %v91
      %v93 = vmul.f32 %v61, %v92
      %v94 = vmul.f32 %v62, %v92
      %v95 = vld [vmem:[%s3 + $0x1] sm:$0x1]
      %v96 = vlaneseq
      %v97 = vshrl.u32 %v96, 7
      %v98 = vsub.s32 0, %v97
      %v99 = vrot.slane %v95, %v98
      %v100 = vadd.f32 %v93, %v99
      %v101 = vadd.f32 %v94, %v99
      %102 = vst.msk [vmem:[#allocation7] sm:$0xff] %vm35, %v100
      %103 = vst.msk [vmem:[#allocation7 + $0x8] sm:$0xff] %vm35, %v101
    $region25: #{tpu_custom_call.1} parent=1 // pred_fallthru
      _
    %p104 = por %p64, %p65
    %p105 = pneg %p104
    // Predicated region
    $region26: #{tpu_custom_call.1} parent=1 // pred_check
      _
    $region27: #{tpu_custom_call.1} parent=1 // pred_check_branch
      %107 = sbr.rel (%p104) target = $region29
    $region28: #{tpu_custom_call.1} parent=1 // pred_region
      %v108 = vlaneseq
      %v109 = vshrl.u32 %v108, 7
      %v110 = vadd.s32 %v109, 8
      %v111 = vstv %s32
      %v112 = vadd.s32 %v109, %v111
      %v113 = vadd.s32 %v110, %v111
      %v114 = vstv %s31
      %vm115 = vcmp.lt.s32.totalorder %v112, %v114
      %vm116 = vcmp.lt.s32.totalorder %v113, %v114
      %v117 = vld [vmem:[%s2] sm:$0x1]
      %v118 = vld [vmem:[%s2 + $0x1] sm:$0x1]
      %v119 = vsel %vm115, 1, 0
      %v120 = vsel %vm116, 1, 0
      %vm121 = vcmp.eq.s32.totalorder %v119, 1
      %vm122 = vcmp.eq.s32.totalorder %v120, 1
      %v123 = vlaneseq
      %v124 = vshrl.u32 %v123, 7
      %v125 = vsub.s32 0, %v124
      %v126 = vrot.slane %v117, %v125
      %v127 = vlaneseq
      %v128 = vshrl.u32 %v127, 7
      %v129 = vsub.s32 0, %v128
      %v130 = vrot.slane %v118, %v129
      %v131 = vsel %vm121, %v126, %v130
      %v132 = vsel %vm122, %v126, %v130
      %v133 = vld [vmem:[%s3] sm:$0x1]
      %v134 = vld [vmem:[%s3 + $0x1] sm:$0x1]
      %v135 = vlaneseq
      %v136 = vshrl.u32 %v135, 7
      %v137 = vsub.s32 0, %v136
      %v138 = vrot.slane %v133, %v137
      %v139 = vlaneseq
      %v140 = vshrl.u32 %v139, 7
      %v141 = vsub.s32 0, %v140
      %v142 = vrot.slane %v134, %v141
      %v143 = vsel %vm121, %v138, %v142
      %v144 = vsel %vm122, %v138, %v142
      %v145 = vmul.f32 %v61, %v131
      %v146 = vmul.f32 %v62, %v132
      %v147 = vadd.f32 %v145, %v143
      %v148 = vadd.f32 %v146, %v144
      %149 = vst.msk [vmem:[#allocation7] sm:$0xff] %vm35, %v147
      %150 = vst.msk [vmem:[#allocation7 + $0x8] sm:$0xff] %vm35, %v148
    $region29: #{tpu_custom_call.1} parent=1 // pred_fallthru
      _
    // Predicated region
    $region30: #{tpu_custom_call.1} parent=1 // pred_check
      _
    $region31: #{tpu_custom_call.1} parent=1 // pred_check_branch
      %152 = sbr.rel (0) target = $region33
    $region32: #{tpu_custom_call.1} parent=1 // pred_region
      %s154 = ssub.s32 256, 256
      %155 = vsyncadd [#allocation6], %s154
      %s156 = sshll.u32 [#allocation7], 4
      %s157 = int_to_ptr.vmem [resolvable:$true] %s156
      %162 = dma.vmem_to_hbm [thread:$0]  %s157, 256, %s4, [#allocation6], 128, 128, 8
    $region33: #{tpu_custom_call.1} parent=1 // pred_fallthru
      _
    // Predicated region
    $region34: #{tpu_custom_call.1} parent=1 // pred_check
      _
    $region35: #{tpu_custom_call.1} parent=1 // pred_check_branch
      %164 = sbr.rel (0) target = $region37
    $region36: #{tpu_custom_call.1} parent=1 // pred_region
      %165 = dma.done [#allocation6], 256
    $region37: #{tpu_custom_call.1} parent=1 // pred_fallthru
      _
    %166 = vsyncpa [#allocation5], 1
    %167 = vsyncpa [#allocation6], 1

</llo_original>
